<compile_context>
chip_gen: v5e
topology: v5e:2x2
jax: 0.10.0
libtpu: 0.0.40
codegen_flags: <defaults>
</compile_context>

<pallas_src>
import math

import jax
import jax.numpy as jnp
from jax.experimental import pallas as pl
from jax.experimental.pallas import tpu as pltpu


def regression_kernel(x_ref, w_ref, b_ref, o_ref):
    # x_ref: (TB, C) VMEM, w_ref: (1, C) VMEM, b_ref: (1, 1) SMEM, o_ref: (TB, 1) VMEM
    x = x_ref[...]
    w = w_ref[...]                                      # broadcasts over TB rows
    s = jnp.sum(x * w, axis=-1, keepdims=True)          # VPU multiply + XLU lane reduce
    y = s + b_ref[0, 0]                                 # scalar bias from SMEM
    o_ref[...] = jax.nn.sigmoid(y).astype(o_ref.dtype)  # EUP exp


def _choose_batch_tile(batch, channel):
    """Largest TB (multiple of 8, capped at 2048) whose double-buffered f32 x
    tile stays under ~8 MiB, safe for every TPU generation's scoped VMEM."""
    budget_bytes = 8 * 1024 * 1024
    tb = budget_bytes // (2 * 4 * channel)              # 2 pipeline buffers x f32
    tb = max(8, min(2048, (tb // 8) * 8))
    padded_b = ((batch + 7) // 8) * 8
    return min(tb, padded_b)


def regression_forward(x, w, b):
    """x: [B, C] f32, w: [1, C] f32 (PyTorch [out=1, in=C] layout), b: [1, 1] f32 -> [B, 1] f32."""
    B, C = x.shape
    TB = _choose_batch_tile(B, C)
    Bp = pl.cdiv(B, TB) * TB
    if Bp != B:
        x = jnp.pad(x, ((0, Bp - B), (0, 0)))           # padded rows are discarded below

    out = pl.pallas_call(
        regression_kernel,
        out_shape=jax.ShapeDtypeStruct((Bp, 1), x.dtype),
        grid=(Bp // TB,),
        in_specs=[
            pl.BlockSpec((TB, C), lambda i: (i, 0)),            # x: streamed batch tiles
            pl.BlockSpec((1, C), lambda i: (0, 0)),             # w: resident, lane-dense
            pl.BlockSpec(memory_space=pltpu.MemorySpace.SMEM),  # b: scalar in SMEM
        ],
        out_specs=pl.BlockSpec((TB, 1), lambda i: (i, 0)),
        compiler_params=pltpu.CompilerParams(
            dimension_semantics=("parallel",),
        ),
        cost_estimate=pl.CostEstimate(
            flops=2 * Bp * C,
            transcendentals=Bp,
            bytes_accessed=4 * (Bp * C + C + Bp),
        ),
    )(x, w, b)
    return out[:B]


def init_params(key, channel):
    """Deterministic init mimicking PyTorch nn.Linear defaults (uniform +/- 1/sqrt(fan_in))."""
    kw, kb = jax.random.split(key)
    bound = 1.0 / math.sqrt(channel)
    # PyTorch weight layout [out_features, in_features] = [1, channel]; keep it lane-dense.
    w = jax.random.uniform(kw, (1, channel), jnp.float32, minval=-bound, maxval=bound)
    b = jax.random.uniform(kb, (1, 1), jnp.float32, minval=-bound, maxval=bound)
    return w, b


if __name__ == "__main__":
    key = jax.random.PRNGKey(0)
    k_x, k_p = jax.random.split(key)

    batch, channel = 8, 32
    x = jax.random.normal(k_x, (batch, channel), jnp.float32)
    w, b = init_params(k_p, channel)

    out = jax.block_until_ready(regression_forward(x, w, b))

    # Reference: same math as torch -> sigmoid(x @ W.T + b)
    ref = jax.nn.sigmoid(x @ w.T + b)
    assert out.shape == (batch, 1)
    assert jnp.allclose(out, ref, atol=1e-5), "mismatch vs. reference"

    print("KERNEL_OK")
</pallas_src>

<mosaic_0001>
module attributes {stable_mosaic.version = 11 : i64} {
  func.func @regression_kernel(%arg0: i32, %arg1: memref<8x32xf32, #tpu.memory_space<vmem>>, %arg2: memref<1x32xf32, #tpu.memory_space<vmem>>, %arg3: memref<1x1xf32, #tpu.memory_space<smem>>, %arg4: memref<8x1xf32, #tpu.memory_space<vmem>>) attributes {dimension_semantics = [#tpu.dimension_semantics<parallel>], iteration_bounds = array<i64: 1>, scalar_prefetch = 0 : i64, scratch_operands = 0 : i64, tpu.core_type = #tpu.core_type<tc>, window_params = [{transform_indices = @transform_0, window_bounds = array<i64: 8, 32>}, {pipeline_mode = #tpu.pipeline_mode<synchronous>, transform_indices = @transform_1, window_bounds = array<i64: 1, 32>}, {transform_indices = @transform_2, window_bounds = array<i64: 1, 1>}, {transform_indices = @transform_3, window_bounds = array<i64: 8, 1>}]} {
    %c0 = arith.constant 0 : index
    %c0_0 = arith.constant 0 : index
    %0 = vector.load %arg1[%c0, %c0_0] : memref<8x32xf32, #tpu.memory_space<vmem>>, vector<8x32xf32>
    %c0_1 = arith.constant 0 : index
    %c0_2 = arith.constant 0 : index
    %1 = vector.load %arg2[%c0_1, %c0_2] : memref<1x32xf32, #tpu.memory_space<vmem>>, vector<1x32xf32>
    %2 = vector.broadcast %1 : vector<1x32xf32> to vector<8x32xf32>
    %3 = arith.mulf %0, %2 : vector<8x32xf32>
    %cst = arith.constant dense<0.000000e+00> : vector<8xf32>
    %4 = vector.multi_reduction <add>, %3, %cst [1] : vector<8x32xf32> to vector<8xf32>
    %5 = vector.shape_cast %4 : vector<8xf32> to vector<8x1xf32>
    %c0_3 = arith.constant 0 : index
    %c0_4 = arith.constant 0 : index
    %6 = memref.load %arg3[%c0_3, %c0_4] : memref<1x1xf32, #tpu.memory_space<smem>>
    %7 = vector.broadcast %6 : f32 to vector<8x1xf32>
    %8 = arith.addf %5, %7 : vector<8x1xf32>
    %9 = arith.negf %8 : vector<8x1xf32>
    %10 = math.exp %9 : vector<8x1xf32>
    %cst_5 = arith.constant 1.000000e+00 : f32
    %11 = vector.broadcast %cst_5 : f32 to vector<8x1xf32>
    %12 = arith.addf %11, %10 : vector<8x1xf32>
    %13 = arith.divf %11, %12 : vector<8x1xf32>
    %c0_6 = arith.constant 0 : index
    %c0_7 = arith.constant 0 : index
    %14 = vector.load %arg4[%c0_6, %c0_7] : memref<8x1xf32, #tpu.memory_space<vmem>>, vector<8x1xf32>
    tpu.vector_store %arg4[%c0_6, %c0_7], %13 {strides = array<i32>} : memref<8x1xf32, #tpu.memory_space<vmem>>, vector<8x1xf32>,
    return
  }
  func.func @transform_0(%arg0: i32) -> (i32, i32) {
    %c0_i32 = arith.constant 0 : i32
    %c0_i32_0 = arith.constant 0 : i32
    return %arg0, %c0_i32 : i32, i32
  }
  func.func @transform_1(%arg0: i32) -> (i32, i32) {
    %c0_i32 = arith.constant 0 : i32
    %c0_i32_0 = arith.constant 0 : i32
    %c0_i32_1 = arith.constant 0 : i32
    return %c0_i32, %c0_i32_0 : i32, i32
  }
  func.func @transform_2(%arg0: i32) -> (i32, i32) {
    %c0_i32 = arith.constant 0 : i32
    %c0_i32_0 = arith.constant 0 : i32
    %c0_i32_1 = arith.constant 0 : i32
    return %c0_i32, %c0_i32_0 : i32, i32
  }
  func.func @transform_3(%arg0: i32) -> (i32, i32) {
    %c0_i32 = arith.constant 0 : i32
    %c0_i32_0 = arith.constant 0 : i32
    return %arg0, %c0_i32 : i32, i32
  }
}

</mosaic_0001>

<llo_original>
// kernel: tpu_custom_call.1
$region0: #{tpu_custom_call.1}
  #allocation0 [shape = 'u32[]', space=smem, size = 0x4, offset = 0x4, fixed_abs, tag = 'smem constant byte address 0x4 - core index']
  #allocation1 [shape = 'u32[72,128]{1,0:T(1,128)}', space=vmem, size = 0x9000, scoped, tag = 'internal scratch']
  #allocation2 [shape = 'f32[1,1]{1,0:T(1,128)S(6)}', space=smem, size = 0x200, scoped, tag = 'scoped memory for tpu_custom_call.1']
  %s0 = inlined_call_operand.hbm [shape: f32[8,32], index: 0, kind: input, shape index: {}]
  %s1 = inlined_call_operand.vmem [shape: f32[1,32], index: 1, kind: input, shape index: {}]
  %s2 = inlined_call_operand.<no memory space> [shape: f32[1,1], index: 2, kind: input, shape index: {}]
  %s3 = inlined_call_operand.vmem [shape: f32[8,1], index: 3, kind: output, shape index: {}]
  %s4 = sld [smem:[#allocation0]]
  $region26: #{tpu_custom_call.1} parent=0
    _
  %s6 = ssub.s32 1, %s4
  %s7 = scalar_select 0, %s6, %s4
  %8 = sst [smem:[#allocation2]] %s2
  $region1: #{tpu_custom_call.1} parent=0
    #allocation3 [shape = 'u8[4096]{0}', space=vmem, size = 0x1000, scoped, tag = 'input window, operand 0, single buffered']
    #allocation4 [shape = 's32[1]{0}', space=sflag, size = 0x4, scoped, tag = 'scoped memory for tpu_custom_call.1']
    %9 = vsyncpa [#allocation4], 0
    // Predicated region
    $region2: #{tpu_custom_call.1} parent=1 // pred_check
      _
    $region3: #{tpu_custom_call.1} parent=1 // pred_check_branch
      %11 = sbr.rel (0) target = $region5
    $region4: #{tpu_custom_call.1} parent=1 // pred_region
      %13 = vsyncadd [#allocation4], 0
      %s15 = sshll.u32 %s0, 4
      %s16 = int_to_ptr.hbm [resolvable:$true] %s15
      %s17 = sshll.u32 [#allocation3], 4
      %s18 = int_to_ptr.vmem [resolvable:$true] %s17
      %20 = dma.hbm_to_vmem [thread:$0]  %s16, 128, %s18, [#allocation4]
    $region5: #{tpu_custom_call.1} parent=1 // pred_fallthru
      _
    // Predicated region
    $region6: #{tpu_custom_call.1} parent=1 // pred_check
      _
    $region7: #{tpu_custom_call.1} parent=1 // pred_check_branch
      %22 = sbr.rel (0) target = $region9
    $region8: #{tpu_custom_call.1} parent=1 // pred_region
      _
    $region9: #{tpu_custom_call.1} parent=1 // pred_fallthru
      _
    // Predicated region
    $region10: #{tpu_custom_call.1} parent=1 // pred_check
      _
    $region11: #{tpu_custom_call.1} parent=1 // pred_check_branch
      %24 = sbr.rel (0) target = $region13
    $region12: #{tpu_custom_call.1} parent=1 // pred_region
      _
    $region13: #{tpu_custom_call.1} parent=1 // pred_fallthru
      _
    // Predicated region
    $region14: #{tpu_custom_call.1} parent=1 // pred_check
      _
    $region15: #{tpu_custom_call.1} parent=1 // pred_check_branch
      %26 = sbr.rel (0) target = $region17
    $region16: #{tpu_custom_call.1} parent=1 // pred_region
      %28 = dma.done [#allocation4], 128
    $region17: #{tpu_custom_call.1} parent=1 // pred_fallthru
      _
    %v29 = vld [vmem:[#allocation3] sm:$0xff]
    %v30 = vld [vmem:[%s1] sm:$0x1]
    %v32 = vperm.slane %v30, 0
    %v34 = vmul.f32 %v29, %v32
    %vm35 = vcmask 261120
    %v36 = vsel %vm35, %v34, 0.0
    %37 = vadd.xlane.f32.xlu0 %v36
    %v38 = vpop.xlane.xlu0 %37
    %s39 = sld [smem:[#allocation2]]
    %v40 = vstv %s39
    %v41 = vadd.f32 %v38, %v40
    %v42 = vxor.u32 %v41, 2147483648
    %v43 = vmul.f32 %v42, 1.442695
    %v44 = vpow.pop %v43
    %v45 = vadd.f32 %v44, 1.0
    %v46 = vrcp.pop %v45
    %v47 = vmul.f32 %v45, %v46
    %v48 = vsub.f32 1.0, %v47
    %v49 = vmul.f32 %v46, %v48
    %v50 = vadd.f32 %v46, %v49
    %vm51 = vweird.f32 %v45
    %vm52 = vweird.f32 %v46
    %vm53 = vmor %vm51, %vm52
    %v54 = vsel %vm53, %v46, %v50
    %v55 = vand.u32 2147483647, %v45
    %vm56 = vcmp.eq.f32.partialorder %v55, 8.507059e+37
    %v57 = vand.u32 %v45, 2147483648
    %v58 = vor.u32 1.1754944e-38, %v57
    %v59 = vsel %vm56, %v58, %v54
    %v60 = vmul.f32 1.0, %v59
    %vm61 = vcmask 7168
    %62 = vst.msk [vmem:[%s3] sm:$0xff] %vm61, %v60
    // Predicated region
    $region18: #{tpu_custom_call.1} parent=1 // pred_check
      _
    $region19: #{tpu_custom_call.1} parent=1 // pred_check_branch
      %64 = sbr.rel (0) target = $region21
    $region20: #{tpu_custom_call.1} parent=1 // pred_region
      _
    $region21: #{tpu_custom_call.1} parent=1 // pred_fallthru
      _
    // Predicated region
    $region22: #{tpu_custom_call.1} parent=1 // pred_check
      _
    $region23: #{tpu_custom_call.1} parent=1 // pred_check_branch
      %66 = sbr.rel (0) target = $region25
    $region24: #{tpu_custom_call.1} parent=1 // pred_region
      _
    $region25: #{tpu_custom_call.1} parent=1 // pred_fallthru
      _
    %67 = vsyncpa [#allocation4], 1

</llo_original>
